<compile_context>
chip_gen: v7x
topology: tpu7x:2x2x1
jax: 0.10.0
libtpu: 0.0.40
codegen_flags: <defaults>
</compile_context>

<pallas_src>
import math

import jax
import jax.numpy as jnp
from jax.experimental import pallas as pl
from jax.experimental.pallas import tpu as pltpu


def _axes_to_squeeze(shape, dim):
    """Replicates torch.squeeze axis selection (static, trace-time)."""
    if dim is None:
        return tuple(i for i, s in enumerate(shape) if s == 1)
    d = dim if dim >= 0 else dim + len(shape)
    # torch.squeeze(dim=d) is a no-op if that dim is not size 1
    return (d,) if shape[d] == 1 else ()


def _copy_kernel(x_ref, o_ref):
    # Pure VMEM-resident copy.  The squeeze itself is metadata and handled by
    # the (free) wrapper-side reshape / BlockSpec plumbing.
    o_ref[...] = x_ref[...]


def _vmem_capacity_bytes():
    """Generation-aware VMEM size; conservative fallback if the query fails."""
    try:
        return int(pltpu.get_tpu_info().vmem_capacity_bytes)
    except Exception:
        return 64 << 20  # v7x per-TC VMEM (smallest of v5e/v6e/v7x)


def _pick_lanes(n):
    """Widest 128-multiple lane width (<=1024) that divides n (n % 128 == 0)."""
    lanes = 128
    while n % (2 * lanes) == 0 and 2 * lanes <= 1024:
        lanes *= 2
    return lanes


def squeeze_pallas(x, dim=None):
    axes = _axes_to_squeeze(x.shape, dim)
    if not axes:
        # torch semantics: squeeze(dim=d) is a no-op when that dim isn't size 1.
        return x
    out_shape = tuple(s for i, s in enumerate(x.shape) if i not in axes)
    if not out_shape:
        # Fully scalar result (every dim size 1): pure metadata, no kernel.
        return jnp.reshape(x, ())

    n = math.prod(out_shape)
    if n == 0 or n % 128 != 0:
        # Ragged element count: a lane-dense kernel is impossible without
        # padding (extra HBM traffic) and a narrow-lane kernel hits masked
        # vst.msk stores at ~4% utilization.  Per the review, bail out to the
        # zero-cost metadata squeeze instead.
        return jax.lax.squeeze(x, axes)

    lanes = _pick_lanes(n)
    rows = n // lanes
    x2d = jnp.reshape(x, (rows, lanes))  # metadata-only row-major flatten

    itemsize = jnp.dtype(x.dtype).itemsize
    # Sub-32-bit dtypes pack along sublanes: keep block_rows a multiple of
    # 32/itemsize (f32->8, bf16->16, int8/fp8->32) so vregs stay fully packed.
    sub_mult = max(8, 32 // itemsize)

    # Generation-aware block cap: ~4 MiB, but never more than vmem/16 so the
    # double-buffered in+out blocks (4x block) stay well inside VMEM on v7x.
    vmem_cap = _vmem_capacity_bytes()
    block_cap = min(4 << 20, vmem_cap // 16)
    row_bytes = lanes * itemsize
    max_block_rows = max(sub_mult, (block_cap // row_bytes) // sub_mult * sub_mult)

    if rows <= max_block_rows:
        block_rows = rows  # full extent: legal regardless of divisibility
    else:
        block_rows = max_block_rows

    # Megacore: make sure there are at least 2 row tiles when rows allow it so
    # both of v7x's TensorCores get work (harmless on v5e/v6e).
    if pl.cdiv(rows, block_rows) < 2 and rows >= 2 * sub_mult:
        block_rows = pl.cdiv(pl.cdiv(rows, 2), sub_mult) * sub_mult

    block_bytes = block_rows * lanes * itemsize
    # Explicit VMEM budget: in+out double-buffered (4x block) plus headroom,
    # at least 32 MiB (v5e scoped default is only 16 MiB), never above physical.
    vmem_limit = min(vmem_cap, max(32 << 20, 4 * block_bytes + (8 << 20)))

    grid = (pl.cdiv(rows, block_rows),)
    y2d = pl.pallas_call(
        _copy_kernel,
        out_shape=jax.ShapeDtypeStruct((rows, lanes), x.dtype),
        grid=grid,
        in_specs=[pl.BlockSpec((block_rows, lanes), lambda i: (i, 0))],
        out_specs=pl.BlockSpec((block_rows, lanes), lambda i: (i, 0)),
        compiler_params=pltpu.CompilerParams(
            dimension_semantics=("parallel",),
            vmem_limit_bytes=int(vmem_limit)),
    )(x2d)
    return jnp.reshape(y2d, out_shape)  # metadata-only


class SqueezePallas:
    """Mirror of the PyTorch Squeeze module."""

    def __init__(self, dim=None):
        self.dim = dim

    def __call__(self, x):
        return squeeze_pallas(x, dim=self.dim)


if __name__ == "__main__":
    key = jax.random.PRNGKey(0)
    k1, k2, k3, k4 = jax.random.split(key, 4)

    # NCHW input with a size-1 channel axis: (2, 1, 16, 16)
    x = jax.random.normal(k1, (2, 1, 16, 16), dtype=jnp.float32)

    # dim=None: squeeze every size-1 axis -> (2, 16, 16)
    y_all = jax.block_until_ready(SqueezePallas(dim=None)(x))
    assert y_all.shape == (2, 16, 16), y_all.shape
    assert y_all.dtype == x.dtype
    assert bool(jnp.array_equal(y_all, jnp.squeeze(x)))

    # dim=1: squeeze only axis 1 -> (2, 16, 16)
    y_one = jax.block_until_ready(SqueezePallas(dim=1)(x))
    assert y_one.shape == (2, 16, 16), y_one.shape
    assert bool(jnp.array_equal(y_one, jnp.squeeze(x, axis=1)))

    # negative dim indexing the same size-1 axis
    y_neg = jax.block_until_ready(SqueezePallas(dim=-3)(x))
    assert bool(jnp.array_equal(y_neg, jnp.squeeze(x, axis=1)))

    # dim pointing at a non-size-1 axis: torch semantics = no-op
    y_noop = jax.block_until_ready(SqueezePallas(dim=0)(x))
    assert y_noop.shape == x.shape
    assert bool(jnp.array_equal(y_noop, x))

    # larger input exercising the multi-tile, lane-dense, megacore-split path:
    # (2, 1, 1024, 512) -> flattened (1024, 1024), >= 2 row tiles
    xb = jax.random.normal(k2, (2, 1, 1024, 512), dtype=jnp.float32)
    yb = jax.block_until_ready(SqueezePallas(dim=1)(xb))
    assert yb.shape == (2, 1024, 512), yb.shape
    assert bool(jnp.array_equal(yb, jnp.squeeze(xb, axis=1)))

    # bf16 input: exercises the dtype-aware sublane rounding (multiple of 16)
    xh = jax.random.normal(k3, (4, 1, 256, 256), dtype=jnp.float32).astype(jnp.bfloat16)
    yh = jax.block_until_ready(SqueezePallas(dim=1)(xh))
    assert yh.shape == (4, 256, 256) and yh.dtype == jnp.bfloat16
    assert bool(jnp.array_equal(yh, jnp.squeeze(xh, axis=1)))

    # element count not divisible by 128: zero-cost lax.squeeze fallback
    xs = jax.random.normal(k4, (2, 1, 3, 5), dtype=jnp.float32)
    ys = jax.block_until_ready(SqueezePallas()(xs))
    assert ys.shape == (2, 3, 5), ys.shape
    assert bool(jnp.array_equal(ys, jnp.squeeze(xs)))

    # all dims size-1 -> scalar (pure-metadata path, no kernel)
    x0 = jnp.ones((1, 1, 1), dtype=jnp.float32)
    y0 = jax.block_until_ready(SqueezePallas()(x0))
    assert y0.shape == () and bool(y0 == 1.0)

    print("KERNEL_OK")
</pallas_src>

<mosaic_0001>
module attributes {stable_mosaic.version = 11 : i64} {
  func.func @_copy_kernel(%arg0: i32, %arg1: memref<1x512xf32, #tpu.memory_space<vmem>>, %arg2: memref<1x512xf32, #tpu.memory_space<vmem>>) attributes {dimension_semantics = [#tpu.dimension_semantics<parallel>], iteration_bounds = array<i64: 1>, scalar_prefetch = 0 : i64, scratch_operands = 0 : i64, tpu.core_type = #tpu.core_type<tc>, window_params = [{transform_indices = @transform_0, window_bounds = array<i64: 1, 512>}, {transform_indices = @transform_1, window_bounds = array<i64: 1, 512>}]} {
    %c0 = arith.constant 0 : index
    %c0_0 = arith.constant 0 : index
    %0 = vector.load %arg1[%c0, %c0_0] : memref<1x512xf32, #tpu.memory_space<vmem>>, vector<1x512xf32>
    %c0_1 = arith.constant 0 : index
    %c0_2 = arith.constant 0 : index
    %1 = vector.load %arg2[%c0_1, %c0_2] : memref<1x512xf32, #tpu.memory_space<vmem>>, vector<1x512xf32>
    tpu.vector_store %arg2[%c0_1, %c0_2], %0 {strides = array<i32>} : memref<1x512xf32, #tpu.memory_space<vmem>>, vector<1x512xf32>,
    return
  }
  func.func @transform_0(%arg0: i32) -> (i32, i32) {
    %c0_i32 = arith.constant 0 : i32
    %c0_i32_0 = arith.constant 0 : i32
    return %arg0, %c0_i32 : i32, i32
  }
  func.func @transform_1(%arg0: i32) -> (i32, i32) {
    %c0_i32 = arith.constant 0 : i32
    %c0_i32_0 = arith.constant 0 : i32
    return %arg0, %c0_i32 : i32, i32
  }
}

</mosaic_0001>

<llo_original>
// kernel: tpu_custom_call.1
$region0: #{tpu_custom_call.1}
  #allocation0 [shape = 'u32[]', space=smem, size = 0x4, offset = 0x4, fixed_abs, tag = 'smem constant byte address 0x4 - core index']
  #allocation1 [shape = 'u32[144,128]{1,0:T(1,128)}', space=vmem, size = 0x12000, scoped, tag = 'internal scratch']
  %s0 = inlined_call_operand.hbm [shape: f32[1,512], index: 0, kind: input, shape index: {}]
  %s1 = inlined_call_operand.hbm [shape: f32[1,512], index: 1, kind: output, shape index: {}]
  %s2 = sld [smem:[#allocation0]]
  $region18: #{tpu_custom_call.1} parent=0
    _
  %s4 = ssub.s32 1, %s2
  %s5 = scalar_select 0, %s4, %s2
  $region1: #{tpu_custom_call.1} parent=0
    #allocation2 [shape = 'u8[2048]{0}', space=vmem, size = 0x800, scoped, tag = 'input window, operand 0, single buffered']
    #allocation3 [shape = 's32[1]{0}', space=sflag, size = 0x4, scoped, tag = 'scoped memory for tpu_custom_call.1']
    #allocation4 [shape = 's32[1]{0}', space=sflag, size = 0x4, scoped, tag = 'scoped memory for tpu_custom_call.1']
    #allocation5 [shape = 'u8[2048]{0}', space=vmem, size = 0x800, scoped, tag = 'output window, operand 0, single buffered']
    %6 = vsyncpa [#allocation3], 0
    %7 = vsyncpa [#allocation4], 0
    // Predicated region
    $region2: #{tpu_custom_call.1} parent=1 // pred_check
      _
    $region3: #{tpu_custom_call.1} parent=1 // pred_check_branch
      %9 = sbr.rel (0) target = $region5
    $region4: #{tpu_custom_call.1} parent=1 // pred_region
      %s11 = ssub.s32 64, 64
      %12 = vsyncadd [#allocation3], %s11
      %s14 = sshll.u32 [#allocation2], 4
      %s15 = int_to_ptr.vmem [resolvable:$true] %s14
      %17 = dma.hbm_to_vmem [thread:$0]  %s0, 64, %s15, [#allocation3]
    $region5: #{tpu_custom_call.1} parent=1 // pred_fallthru
      _
    // Predicated region
    $region6: #{tpu_custom_call.1} parent=1 // pred_check
      _
    $region7: #{tpu_custom_call.1} parent=1 // pred_check_branch
      %19 = sbr.rel (0) target = $region9
    $region8: #{tpu_custom_call.1} parent=1 // pred_region
      %20 = dma.done [#allocation3], 64
    $region9: #{tpu_custom_call.1} parent=1 // pred_fallthru
      _
    %v21 = vld [vmem:[#allocation2] sm:$0xf]
    %v22 = vlaneseq
    %vm23 = vcmp.ge.s32.totalorder %v22, 0
    %vm24 = vcmp.lt.s32.totalorder %v22, 512
    %vm25 = vmand %vm23, %vm24
    %26 = vst.msk [vmem:[#allocation5] sm:$0xf] %vm25, %v21
    // Predicated region
    $region10: #{tpu_custom_call.1} parent=1 // pred_check
      _
    $region11: #{tpu_custom_call.1} parent=1 // pred_check_branch
      %28 = sbr.rel (0) target = $region13
    $region12: #{tpu_custom_call.1} parent=1 // pred_region
      %s30 = ssub.s32 64, 64
      %31 = vsyncadd [#allocation4], %s30
      %s33 = sshll.u32 [#allocation5], 4
      %s34 = int_to_ptr.vmem [resolvable:$true] %s33
      %36 = dma.vmem_to_hbm [thread:$0]  %s34, 64, %s1, [#allocation4]
    $region13: #{tpu_custom_call.1} parent=1 // pred_fallthru
      _
    // Predicated region
    $region14: #{tpu_custom_call.1} parent=1 // pred_check
      _
    $region15: #{tpu_custom_call.1} parent=1 // pred_check_branch
      %38 = sbr.rel (0) target = $region17
    $region16: #{tpu_custom_call.1} parent=1 // pred_region
      %39 = dma.done [#allocation4], 64
    $region17: #{tpu_custom_call.1} parent=1 // pred_fallthru
      _
    %40 = vsyncpa [#allocation3], 1
    %41 = vsyncpa [#allocation4], 1

</llo_original>
